<compile_context>
chip_gen: v7x
topology: tpu7x:2x2x1
jax: 0.10.0
libtpu: 0.0.40
codegen_flags: <defaults>
</compile_context>

<pallas_src>
import functools

import jax
import jax.numpy as jnp
from jax import lax
from jax.experimental import pallas as pl
from jax.experimental.pallas import tpu as pltpu


def _round_up(x, m):
    return ((x + m - 1) // m) * m


@functools.lru_cache(maxsize=1)
def _vmem_budget_bytes():
    """Per-core VMEM capacity minus headroom; conservative 64 MiB fallback."""
    try:
        cap = int(pltpu.get_tpu_info().vmem_capacity_bytes)
        if cap <= 0:
            raise ValueError("bad vmem capacity")
    except Exception:
        cap = 64 << 20  # v7x physical VMEM per TensorCore; safe everywhere
    return int(cap * 0.85)


def _prn_kernel(x_ref, wq_ref, wm_ref, o_ref):
    # x_ref: (tm, dim)   wq_ref: (n_proto, dim) bf16   wm_ref: (dim, n_proto) bf16
    x_bf = x_ref[...].astype(jnp.bfloat16)  # no-op if x already bf16
    # s = x @ Wq^T -> (tm, n_proto); bf16 MXU dot, f32 accumulation.
    s = lax.dot_general(
        x_bf, wq_ref[...],
        dimension_numbers=(((1,), (1,)), ((), ())),
        preferred_element_type=jnp.float32,
    )
    # Numerically-stable softmax over the last axis, kept in f32 vregs.
    s = s - jnp.max(s, axis=-1, keepdims=True)
    e = jnp.exp(s)
    denom = jnp.sum(e, axis=-1, keepdims=True)
    # EUP vrcp (separate slot, ~1e-3 rel. error) keeps the VALU free.
    query = e * pl.reciprocal(denom, approx=True)
    # z = query @ Wm^T -> (tm, dim); bf16 MXU dot, f32 accumulation.
    z = lax.dot_general(
        query.astype(jnp.bfloat16), wm_ref[...],
        dimension_numbers=(((1,), (1,)), ((), ())),
        preferred_element_type=jnp.float32,
    )
    o_ref[...] = z.astype(o_ref.dtype)
    # TODO(synk): dropout is identity in eval mode; training-mode dropout
    # (scaled Bernoulli mask via pltpu.prng_*) is intentionally not applied.


@functools.partial(jax.jit, static_argnames=("tm",))
def prn_forward(x, wq, wm, *, tm=512):
    """PRN forward (eval mode).

    x:  (..., dim)          -- f32 or bf16; output has the same dtype as x
    wq: (n_prototype, dim)  -- nn.Linear(dim, n_prototype, bias=False).weight
    wm: (dim, n_prototype)  -- nn.Linear(n_prototype, dim, bias=False).weight
    """
    dim = x.shape[-1]
    n_proto = wq.shape[0]
    orig_shape = x.shape
    x2 = x.reshape(-1, dim)
    m = x2.shape[0]
    out_dtype = x.dtype  # bf16 in -> bf16 out (halves streamed HBM bytes)

    # Weights are tiny: cast once here so the kernel never re-casts the
    # resident weights on every grid step.
    wq_bf = wq.astype(jnp.bfloat16)
    wm_bf = wm.astype(jnp.bfloat16)

    # --- Row-tile selection --------------------------------------------------
    # sublane aligned; >=2 grid steps when m > 8 so the "parallel" axis can be
    # sharded across both TensorCores on v7x; shrunk to fit the VMEM budget.
    m8 = _round_up(max(m, 1), 8)
    tm_eff = max(8, min(int(tm), _round_up(pl.cdiv(m8, 2), 8)))

    x_isz = jnp.dtype(x.dtype).itemsize
    o_isz = jnp.dtype(out_dtype).itemsize
    w_bytes = 2 * dim * n_proto * 2  # both bf16 weight matrices, raw

    def vmem_needed(t):
        tiles = 2 * t * dim * (x_isz + o_isz)   # double-buffered x / out tiles
        weights = 2 * w_bytes                    # Pallas double-buffers them too
        scratch = t * (8 * n_proto + 8 * dim)    # f32 s/e/query + z + slack
        return tiles + weights + scratch

    budget = _vmem_budget_bytes()
    while tm_eff > 8 and vmem_needed(tm_eff) > budget:
        tm_eff = max(8, _round_up(tm_eff // 2, 8))

    grid = (pl.cdiv(m, tm_eff),)
    vmem_limit = int(min(budget, max(32 << 20, 2 * vmem_needed(tm_eff))))

    flops = 4 * m * dim * n_proto  # two matmuls
    bytes_accessed = m * dim * (x_isz + o_isz) + w_bytes

    out = pl.pallas_call(
        _prn_kernel,
        out_shape=jax.ShapeDtypeStruct((m, dim), out_dtype),
        grid_spec=pltpu.PrefetchScalarGridSpec(
            num_scalar_prefetch=0,
            grid=grid,
            in_specs=[
                pl.BlockSpec((tm_eff, dim), lambda i: (i, 0)),
                pl.BlockSpec((n_proto, dim), lambda i: (0, 0)),   # resident
                pl.BlockSpec((dim, n_proto), lambda i: (0, 0)),   # resident
            ],
            out_specs=pl.BlockSpec((tm_eff, dim), lambda i: (i, 0)),
        ),
        compiler_params=pltpu.CompilerParams(
            dimension_semantics=("parallel",),
            vmem_limit_bytes=vmem_limit,
        ),
        cost_estimate=pl.CostEstimate(
            flops=flops,
            transcendentals=m * n_proto,
            bytes_accessed=bytes_accessed,
        ),
    )(x2, wq_bf, wm_bf)

    return out.reshape(orig_shape)


def _reference(x, wq, wm):
    s = x @ wq.T
    q = jax.nn.softmax(s, axis=-1)
    return q @ wm.T


if __name__ == "__main__":
    key = jax.random.PRNGKey(0)
    k_x, k_q, k_m, k_x2 = jax.random.split(key, 4)

    # Lane-friendly small shapes: dim multiple of 128 -> lane-dense stores.
    batch, seq, dim, n_prototype = 2, 8, 128, 64

    x = jax.random.normal(k_x, (batch, seq, dim), dtype=jnp.float32)
    # PyTorch nn.Linear weight convention: (out_features, in_features).
    wq = jax.random.normal(k_q, (n_prototype, dim), dtype=jnp.float32) * 0.1
    wm = jax.random.normal(k_m, (dim, n_prototype), dtype=jnp.float32) * 0.1

    # 1) f32 path, tile-aligned M (m=16 -> grid=(2,)).
    out = jax.block_until_ready(prn_forward(x, wq, wm))
    ref = _reference(x, wq, wm)
    assert out.shape == (batch, seq, dim)
    assert out.dtype == x.dtype
    assert jnp.allclose(out, ref, atol=2e-2, rtol=2e-2), (
        float(jnp.max(jnp.abs(out - ref)))
    )

    # 2) Ragged M (no wrapper pad/slice): batch=3, seq=7 -> m=21, boundary block.
    x_rag = jax.random.normal(k_x2, (3, 7, dim), dtype=jnp.float32)
    out_rag = jax.block_until_ready(prn_forward(x_rag, wq, wm))
    ref_rag = _reference(x_rag, wq, wm)
    assert out_rag.shape == (3, 7, dim)
    assert jnp.allclose(out_rag, ref_rag, atol=2e-2, rtol=2e-2), (
        float(jnp.max(jnp.abs(out_rag - ref_rag)))
    )

    # 3) bf16 activations in -> bf16 out (the big HBM-traffic lever).
    x_bf = x.astype(jnp.bfloat16)
    out_bf = jax.block_until_ready(prn_forward(x_bf, wq, wm))
    assert out_bf.dtype == jnp.bfloat16
    assert jnp.allclose(out_bf.astype(jnp.float32), ref, atol=1e-1, rtol=1e-1)

    print("KERNEL_OK")
</pallas_src>

<mosaic_0001>
module attributes {stable_mosaic.version = 11 : i64} {
  func.func @_prn_kernel(%arg0: i32, %arg1: memref<8x128xf32, #tpu.memory_space<vmem>>, %arg2: memref<64x128xbf16, #tpu.memory_space<vmem>>, %arg3: memref<128x64xbf16, #tpu.memory_space<vmem>>, %arg4: memref<8x128xf32, #tpu.memory_space<vmem>>) attributes {dimension_semantics = [#tpu.dimension_semantics<parallel>], iteration_bounds = array<i64: 2>, scalar_prefetch = 0 : i64, scratch_operands = 0 : i64, tpu.core_type = #tpu.core_type<tc>, window_params = [{transform_indices = @transform_0, window_bounds = array<i64: 8, 128>}, {pipeline_mode = #tpu.pipeline_mode<synchronous>, transform_indices = @transform_1, window_bounds = array<i64: 64, 128>}, {pipeline_mode = #tpu.pipeline_mode<synchronous>, transform_indices = @transform_2, window_bounds = array<i64: 128, 64>}, {transform_indices = @transform_3, window_bounds = array<i64: 8, 128>}]} {
    %c0 = arith.constant 0 : index
    %c0_0 = arith.constant 0 : index
    %0 = vector.load %arg1[%c0, %c0_0] : memref<8x128xf32, #tpu.memory_space<vmem>>, vector<8x128xf32>
    %1 = arith.truncf %0 : vector<8x128xf32> to vector<8x128xbf16>
    %c0_1 = arith.constant 0 : index
    %c0_2 = arith.constant 0 : index
    %2 = vector.load %arg2[%c0_1, %c0_2] : memref<64x128xbf16, #tpu.memory_space<vmem>>, vector<64x128xbf16>
    %cst = arith.constant dense<0.000000e+00> : vector<8x64xf32>
    %3 = tpu.matmul %1, %2, %cst {dimension_numbers = #tpu.dot_dimension_numbers<[1], [1], [0], [0], [0, 0, 1, 0], [], []>} : vector<8x128xbf16>, vector<64x128xbf16>, vector<8x64xf32> -> vector<8x64xf32>
    %cst_3 = arith.constant dense<0xFF800000> : vector<8xf32>
    %4 = vector.multi_reduction <maximumf>, %3, %cst_3 [1] : vector<8x64xf32> to vector<8xf32>
    %5 = vector.shape_cast %4 : vector<8xf32> to vector<8x1xf32>
    %6 = vector.broadcast %5 : vector<8x1xf32> to vector<8x64xf32>
    %7 = arith.subf %3, %6 : vector<8x64xf32>
    %8 = math.exp %7 : vector<8x64xf32>
    %cst_4 = arith.constant dense<0.000000e+00> : vector<8xf32>
    %9 = vector.multi_reduction <add>, %8, %cst_4 [1] : vector<8x64xf32> to vector<8xf32>
    %10 = vector.shape_cast %9 : vector<8xf32> to vector<8x1xf32>
    %11 = tpu.reciprocal %10 {approx = true} : vector<8x1xf32> -> vector<8x1xf32>
    %12 = vector.broadcast %11 : vector<8x1xf32> to vector<8x64xf32>
    %13 = arith.mulf %8, %12 : vector<8x64xf32>
    %14 = arith.truncf %13 : vector<8x64xf32> to vector<8x64xbf16>
    %c0_5 = arith.constant 0 : index
    %c0_6 = arith.constant 0 : index
    %15 = vector.load %arg3[%c0_5, %c0_6] : memref<128x64xbf16, #tpu.memory_space<vmem>>, vector<128x64xbf16>
    %cst_7 = arith.constant dense<0.000000e+00> : vector<8x128xf32>
    %16 = tpu.matmul %14, %15, %cst_7 {dimension_numbers = #tpu.dot_dimension_numbers<[1], [1], [0], [0], [0, 0, 1, 0], [], []>} : vector<8x64xbf16>, vector<128x64xbf16>, vector<8x128xf32> -> vector<8x128xf32>
    %c0_8 = arith.constant 0 : index
    %c0_9 = arith.constant 0 : index
    %17 = vector.load %arg4[%c0_8, %c0_9] : memref<8x128xf32, #tpu.memory_space<vmem>>, vector<8x128xf32>
    tpu.vector_store %arg4[%c0_8, %c0_9], %16 {strides = array<i32>} : memref<8x128xf32, #tpu.memory_space<vmem>>, vector<8x128xf32>,
    return
  }
  func.func @transform_0(%arg0: i32) -> (i32, i32) {
    %c0_i32 = arith.constant 0 : i32
    %c0_i32_0 = arith.constant 0 : i32
    return %arg0, %c0_i32 : i32, i32
  }
  func.func @transform_1(%arg0: i32) -> (i32, i32) {
    %c0_i32 = arith.constant 0 : i32
    %c0_i32_0 = arith.constant 0 : i32
    %c0_i32_1 = arith.constant 0 : i32
    return %c0_i32, %c0_i32_0 : i32, i32
  }
  func.func @transform_2(%arg0: i32) -> (i32, i32) {
    %c0_i32 = arith.constant 0 : i32
    %c0_i32_0 = arith.constant 0 : i32
    %c0_i32_1 = arith.constant 0 : i32
    return %c0_i32, %c0_i32_0 : i32, i32
  }
  func.func @transform_3(%arg0: i32) -> (i32, i32) {
    %c0_i32 = arith.constant 0 : i32
    %c0_i32_0 = arith.constant 0 : i32
    return %arg0, %c0_i32 : i32, i32
  }
}

</mosaic_0001>

<llo_original>
// kernel: prn_forward.1
$region0: #{prn_forward.1}
  #allocation0 [shape = 'u32[]', space=smem, size = 0x4, offset = 0x4, fixed_abs, tag = 'smem constant byte address 0x4 - core index']
  #allocation1 [shape = 'u32[144,128]{1,0:T(1,128)}', space=vmem, size = 0x12000, scoped, tag = 'internal scratch']
  %s0 = inlined_call_operand.vmem [shape: f32[16,128], index: 0, kind: input, shape index: {}]
  %s1 = inlined_call_operand.vmem [shape: bf16[64,128], index: 1, kind: input, shape index: {}]
  %s2 = inlined_call_operand.vmem [shape: bf16[128,64], index: 2, kind: input, shape index: {}]
  %s3 = inlined_call_operand.hbm [shape: f32[16,128], index: 3, kind: output, shape index: {}]
  %s4 = sld [smem:[#allocation0]]
  $region45: #{prn_forward.1} parent=0
    _
  %s6 = ssub.s32 1, %s4
  %s7 = scalar_select 0, %s6, %s4
  $region1: #{prn_forward.1} parent=0
    #allocation2 [shape = 'u8[8192]{0}', space=vmem, size = 0x2000, scoped, tag = 'output window, operand 0']
    #allocation3 [shape = 's32[2]{0}', space=sflag, size = 0x8, scoped, tag = 'scoped memory for prn_forward.1']
    %8 = vsyncpa [#allocation3], 0
    %s9 = scalar_lea.sflag [#allocation3], 1
    %10 = vsyncpa %s9, 0
    loop: start=0, step=1, limit=4
    $region2: #{prn_forward.1} parent=1 // loop_pre_header
      _
    $region3: #{prn_forward.1} parent=1 // loop_header
      %s12 = sphi 0, %s16
      %p13 = scmp.ge.s32.totalorder %s12, 4
      %s22 = sphi 0, %s24
      %s25 = sphi 0, %s22
      %s26 = sphi 0, %s25
      %s42 = sphi 0, %s26
      %s46 = sphi 0, %s46
      %s48 = sphi 0, %s46
      %s49 = sphi 0, %s48
      %s63 = sphi 0, %s49
      %s67 = sphi 0, %s67
      %s69 = sphi 0, %s67
      %s70 = sphi 0, %s69
      %s84 = sphi 0, %s70
      %s90 = sphi 0, %s92
      %s93 = sphi 0, %s90
      %s94 = sphi 0, %s93
      %s110 = sphi 0, %s94
    $region4: #{prn_forward.1} parent=1 // loop_header_branch
      %15 = sbr.rel (%p13) target = $region8
    $region5: #{prn_forward.1} parent=1 // loop_body
      %s17 = ssub.s32 %s12, 1
      %s18 = ssub.s32 %s12, 2
      %s19 = sadd.s32 %s12, 1
      %s20 = ssub.s32 %s12, %s19
      %p21 = scmp.eq.s32.totalorder %s20, 0
      %s23 = sadd.s32 %s22, 1
      %s24 = scalar_select %p21, %s22, %s23
      %p27 = pneg %p21
      %p28 = scmp.eq.s32.totalorder %s12, 1
      %p29 = por %p27, %p28
      %p30 = scmp.ne.s32.totalorder %s22, %s25
      %p31 = scmp.eq.s32.totalorder %s12, 0
      %p32 = por %p30, %p31
      %p33 = scmp.ne.s32.totalorder %s22, %s25
      %p34 = scmp.eq.s32.totalorder %s17, 1
      %p35 = por %p33, %p34
      %p36 = scmp.ne.s32.totalorder %s25, %s26
      %p37 = scmp.eq.s32.totalorder %s17, 0
      %p38 = por %p36, %p37
      %p39 = scmp.ne.s32.totalorder %s25, %s26
      %p40 = scmp.eq.s32.totalorder %s18, 1
      %p41 = por %p39, %p40
      %p43 = scmp.ne.s32.totalorder %s26, %s42
      %p44 = scmp.eq.s32.totalorder %s18, 0
      %p45 = por %p43, %p44
      %s47 = sadd.s32 %s46, 1
      %p50 = scmp.eq.s32.totalorder %s12, 1
      %p51 = scmp.ne.s32.totalorder %s46, %s48
      %p52 = scmp.eq.s32.totalorder %s12, 0
      %p53 = por %p51, %p52
      %p54 = scmp.ne.s32.totalorder %s46, %s48
      %p55 = scmp.eq.s32.totalorder %s17, 1
      %p56 = por %p54, %p55
      %p57 = scmp.ne.s32.totalorder %s48, %s49
      %p58 = scmp.eq.s32.totalorder %s17, 0
      %p59 = por %p57, %p58
      %p60 = scmp.ne.s32.totalorder %s48, %s49
      %p61 = scmp.eq.s32.totalorder %s18, 1
      %p62 = por %p60, %p61
      %p64 = scmp.ne.s32.totalorder %s49, %s63
      %p65 = scmp.eq.s32.totalorder %s18, 0
      %p66 = por %p64, %p65
      %s68 = sadd.s32 %s67, 1
      %p71 = scmp.eq.s32.totalorder %s12, 1
      %p72 = scmp.ne.s32.totalorder %s67, %s69
      %p73 = scmp.eq.s32.totalorder %s12, 0
      %p74 = por %p72, %p73
      %p75 = scmp.ne.s32.totalorder %s67, %s69
      %p76 = scmp.eq.s32.totalorder %s17, 1
      %p77 = por %p75, %p76
      %p78 = scmp.ne.s32.totalorder %s69, %s70
      %p79 = scmp.eq.s32.totalorder %s17, 0
      %p80 = por %p78, %p79
      %p81 = scmp.ne.s32.totalorder %s69, %s70
      %p82 = scmp.eq.s32.totalorder %s18, 1
      %p83 = por %p81, %p82
      %p85 = scmp.ne.s32.totalorder %s70, %s84
      %p86 = scmp.eq.s32.totalorder %s18, 0
      %p87 = por %p85, %p86
      %s88 = ssub.s32 %s12, %s19
      %p89 = scmp.eq.s32.totalorder %s88, 0
      %s91 = sadd.s32 %s90, 1
      %s92 = scalar_select %p89, %s90, %s91
      %p95 = pneg %p89
      %p96 = scmp.eq.s32.totalorder %s12, 1
      %p97 = por %p95, %p96
      %p98 = scmp.ne.s32.totalorder %s90, %s93
      %p99 = scmp.eq.s32.totalorder %s12, 0
      %p100 = por %p98, %p99
      %p101 = scmp.ne.s32.totalorder %s90, %s93
      %p102 = scmp.eq.s32.totalorder %s17, 1
      %p103 = por %p101, %p102
      %p104 = scmp.ne.s32.totalorder %s93, %s94
      %p105 = scmp.eq.s32.totalorder %s17, 0
      %p106 = por %p104, %p105
      %p107 = scmp.ne.s32.totalorder %s93, %s94
      %p108 = scmp.eq.s32.totalorder %s18, 1
      %p109 = por %p107, %p108
      %p111 = scmp.ne.s32.totalorder %s94, %s110
      %p112 = scmp.eq.s32.totalorder %s18, 0
      %p113 = por %p111, %p112
      %p114 = scmp.le.s32.totalorder 1, %s12
      %p115 = scmp.lt.s32.totalorder %s12, 3
      %p116 = pnand %p114, %p115
      %p117 = pneg %p116
      // Predicated region
      $region9: #{prn_forward.1} parent=5 // pred_check
        _
      $region10: #{prn_forward.1} parent=5 // pred_check_branch
        %119 = sbr.rel (%p116) target = $region12
      $region11: #{prn_forward.1} parent=5 // pred_region
        %s120 = ssub.s32 %s12, 1
        // Predicated region
        $region13: #{prn_forward.1} parent=11 // pred_check
          %p121 = pneg %p59
        $region14: #{prn_forward.1} parent=11 // pred_check_branch
          %123 = sbr.rel (%p121) target = $region16
        $region15: #{prn_forward.1} parent=11 // pred_region
          _
        $region16: #{prn_forward.1} parent=11 // pred_fallthru
          _
        // Predicated region
        $region17: #{prn_forward.1} parent=11 // pred_check
          %p124 = pneg %p80
        $region18: #{prn_forward.1} parent=11 // pred_check_branch
          %126 = sbr.rel (%p124) target = $region20
        $region19: #{prn_forward.1} parent=11 // pred_region
          _
        $region20: #{prn_forward.1} parent=11 // pred_fallthru
          _
      $region12: #{prn_forward.1} parent=5 // pred_fallthru
        _
      %p127 = scmp.lt.s32.totalorder %s12, 2
      // Predicated region
      $region21: #{prn_forward.1} parent=5 // pred_check
        %p128 = pneg %p127
      $region22: #{prn_forward.1} parent=5 // pred_check_branch
        %130 = sbr.rel (%p128) target = $region24
      $region23: #{prn_forward.1} parent=5 // pred_region
        // Predicated region
        $region25: #{prn_forward.1} parent=23 // pred_check
          %p131 = pneg %p32
        $region26: #{prn_forward.1} parent=23 // pred_check_branch
          %133 = sbr.rel (%p131) target = $region28
        $region27: #{prn_forward.1} parent=23 // pred_region
          %p134 = scmp.lt.s32.totalorder %s12, 1
          %s135 = scalar_select %p134, %s12, 1
          %s136 = smul.addr %s135, 8
          %s137 = scalar_lea.vmem %s0, %s136
        $region28: #{prn_forward.1} parent=23 // pred_fallthru
          _
      $region24: #{prn_forward.1} parent=5 // pred_fallthru
        _
      %p138 = scmp.le.s32.totalorder 1, %s12
      %p139 = scmp.lt.s32.totalorder %s12, 3
      %p140 = pnand %p138, %p139
      %p141 = pneg %p140
      // Predicated region
      $region29: #{prn_forward.1} parent=5 // pred_check
        _
      $region30: #{prn_forward.1} parent=5 // pred_check_branch
        %143 = sbr.rel (%p140) target = $region32
      $region31: #{prn_forward.1} parent=5 // pred_region
        %s144 = ssub.s32 %s12, 1
        %p145 = scmp.lt.s32.totalorder %s17, 1
        %s146 = scalar_select %p145, %s17, 1
        %s147 = smul.addr %s146, 8
        %s148 = scalar_lea.vmem %s0, %s147
        %p149 = pneg %p38
        %p150 = pneg %p35
        %p151 = pneg %p59
        %p152 = pneg %p56
        %p153 = pneg %p80
        %p154 = pneg %p77
        %p155 = pneg %p106
        %p156 = pneg %p103
        %s157 = sand.u32 %s93, 1
        %s158 = scalar_lea.sflag [#allocation3], %s157
        %s159 = sand.u32 %s93, 1
        %s160 = smul.addr %s159, 8
        %s161 = scalar_lea.vmem [#allocation2], %s160
        %p162 = scmp.lt.s32.totalorder %s17, 1
        %s163 = scalar_select %p162, %s17, 1
        %s164 = smul.addr %s163, 8
        %s165 = scalar_lea.vmem %s0, %s164
        %v167 = vld [vmem:[%s165] sm:$0xff]
        %v168 = vpack.c.bf16 %v167, %v167
        %v169 = vld [vmem:[%s1] sm:$0xf]
        %v170 = vld [vmem:[%s1 + $0x4] sm:$0xf]
        %v171 = vld [vmem:[%s1 + $0x8] sm:$0xf]
        %v172 = vld [vmem:[%s1 + $0xc] sm:$0xf]
        %v173 = vld [vmem:[%s1 + $0x10] sm:$0xf]
        %v174 = vld [vmem:[%s1 + $0x14] sm:$0xf]
        %v175 = vld [vmem:[%s1 + $0x18] sm:$0xf]
        %v176 = vld [vmem:[%s1 + $0x1c] sm:$0xf]
        %v185 = vunpack.c.l.b16 %v169
        %v186 = vunpack.c.l.b16 %v170
        %v187 = vunpack.c.l.b16 %v171
        %v188 = vunpack.c.l.b16 %v172
        %v189 = vunpack.c.l.b16 %v173
        %v190 = vunpack.c.l.b16 %v174
        %v191 = vunpack.c.l.b16 %v175
        %v192 = vunpack.c.l.b16 %v176
        %v193 = vpack.c.b16 %v186, %v185
        %v194 = vpack.c.b16 %v188, %v187
        %v195 = vpack.c.b16 %v190, %v189
        %v196 = vpack.c.b16 %v192, %v191
        %201 = vmatprep.subr.bf16.mxu0 0
        %202 = vmatpush1.bf16.xpose.msra.mxu0 %v193
        %203 = vmatprep.subr.bf16.mxu0 0
        %204 = vmatpush1.bf16.xpose.msra.mxu0 %v194
        %205 = vmatprep.subr.bf16.mxu0 0
        %206 = vmatpush1.bf16.xpose.msra.mxu0 %v195
        %207 = vmatprep.subr.bf16.mxu0 0
        %208 = vmatpush1.bf16.xpose.msra.mxu0 %v196
        %209 = vmatprep.subr.bf16.mxu0 0
        %210 = vmatpush1.bf16.xpose.msra.mxu0 0
        %211 = vmatprep.subr.bf16.mxu0 0
        %212 = vmatpush1.bf16.xpose.msra.mxu0 0
        %213 = vmatprep.subr.bf16.mxu0 0
        %214 = vmatpush1.bf16.xpose.msra.mxu0 0
        %215 = vmatprep.subr.bf16.mxu0 0
        %216 = vmatpush1.bf16.xpose.msra.mxu0 0
        %217 = vmatprep.subr.bf16.mxu0 0
        %218 = vmatpush1.bf16.xpose.msra.mxu0 0
        %219 = vmatprep.subr.bf16.mxu0 0
        %220 = vmatpush1.bf16.xpose.msra.mxu0 0
        %221 = vmatprep.subr.bf16.mxu0 0
        %222 = vmatpush1.bf16.xpose.msra.mxu0 0
        %223 = vmatprep.subr.bf16.mxu0 0
        %224 = vmatpush1.bf16.xpose.msra.mxu0 0
        %225 = vmatprep.subr.bf16.mxu0 0
        %226 = vmatpush1.bf16.xpose.msra.mxu0 0
        %227 = vmatprep.subr.bf16.mxu0 0
        %228 = vmatpush1.bf16.xpose.msra.mxu0 0
        %229 = vmatprep.subr.bf16.mxu0 0
        %230 = vmatpush1.bf16.xpose.msra.mxu0 0
        %231 = vmatprep.subr.bf16.mxu0 0
        %232 = vmatpush1.bf16.xpose.msra.mxu0 0
        %233 = vmatprep.mubr.bf16.mxu0 0
        %234 = vmatmul.mubr.bf16.gmra.mrb[0].mxu0 %v168
        %v235 = vpop.f32.mrb[0].mxu0
        %v236 = vadd.f32 0.0, %v235
        %v237 = vpop.f32.mrb[0].mxu0
        %v238 = vpop.f32.mrb[0].mxu0
        %v239 = vpop.f32.mrb[0].mxu0
        %240 = vdwg.mxu0
        %vm241 = vcmask 523264
        %v242 = vsel %vm241, %v236, -inf
        %243 = vmax.xlane.f32.xlu0 %v242
        %v244 = vpop.xlane.xlu0 %243
        %v245 = vsub.f32 %v236, %v244
        %v246 = vmul.f32 %v245, 1.442695
        %v247 = vpow.pop %v246
        %v248 = vsel %vm241, %v247, 0.0
        %249 = vadd.xlane.f32.xlu0 %v248
        %v250 = vpop.xlane.xlu0 %249
        %v251 = vrcp.pop %v250
        %v252 = vmul.f32 %v247, %v251
        %v253 = vpack.c.bf16 %v252, %v252
        %v254 = vld [vmem:[%s2] sm:$0xf]
        %v255 = vld [vmem:[%s2 + $0x4] sm:$0xf]
        %v256 = vld [vmem:[%s2 + $0x8] sm:$0xf]
        %v257 = vld [vmem:[%s2 + $0xc] sm:$0xf]
        %v258 = vld [vmem:[%s2 + $0x10] sm:$0xf]
        %v259 = vld [vmem:[%s2 + $0x14] sm:$0xf]
        %v260 = vld [vmem:[%s2 + $0x18] sm:$0xf]
        %v261 = vld [vmem:[%s2 + $0x1c] sm:$0xf]
        %v262 = vld [vmem:[%s2 + $0x20] sm:$0xf]
        %v263 = vld [vmem:[%s2 + $0x24] sm:$0xf]
        %v264 = vld [vmem:[%s2 + $0x28] sm:$0xf]
        %v265 = vld [vmem:[%s2 + $0x2c] sm:$0xf]
        %v266 = vld [vmem:[%s2 + $0x30] sm:$0xf]
        %v267 = vld [vmem:[%s2 + $0x34] sm:$0xf]
        %v268 = vld [vmem:[%s2 + $0x38] sm:$0xf]
        %v269 = vld [vmem:[%s2 + $0x3c] sm:$0xf]
        %v286 = vunpack.c.l.b16 %v254
        %v287 = vunpack.c.l.b16 %v255
        %v288 = vunpack.c.l.b16 %v256
        %v289 = vunpack.c.l.b16 %v257
        %v290 = vunpack.c.l.b16 %v258
        %v291 = vunpack.c.l.b16 %v259
        %v292 = vunpack.c.l.b16 %v260
        %v293 = vunpack.c.l.b16 %v261
        %v294 = vunpack.c.l.b16 %v262
        %v295 = vunpack.c.l.b16 %v263
        %v296 = vunpack.c.l.b16 %v264
        %v297 = vunpack.c.l.b16 %v265
        %v298 = vunpack.c.l.b16 %v266
        %v299 = vunpack.c.l.b16 %v267
        %v300 = vunpack.c.l.b16 %v268
        %v301 = vunpack.c.l.b16 %v269
        %v302 = vpack.c.b16 %v287, %v286
        %v303 = vpack.c.b16 %v289, %v288
        %v304 = vpack.c.b16 %v291, %v290
        %v305 = vpack.c.b16 %v293, %v292
        %v306 = vpack.c.b16 %v295, %v294
        %v307 = vpack.c.b16 %v297, %v296
        %v308 = vpack.c.b16 %v299, %v298
        %v309 = vpack.c.b16 %v301, %v300
        %v311 = vsel %vm241, %v253, 0
        %v314 = vsel %vm241, %v302, 0
        %v317 = vsel %vm241, %v303, 0
        %v320 = vsel %vm241, %v304, 0
        %v323 = vsel %vm241, %v305, 0
        %v326 = vsel %vm241, %v306, 0
        %v329 = vsel %vm241, %v307, 0
        %v332 = vsel %vm241, %v308, 0
        %v335 = vsel %vm241, %v309, 0
        %337 = vmatprep.subr.bf16.mxu0 0
        %338 = vmatpush1.bf16.xpose.msra.mxu0 %v314
        %339 = vmatprep.subr.bf16.mxu0 0
        %340 = vmatpush1.bf16.xpose.msra.mxu0 %v317
        %341 = vmatprep.subr.bf16.mxu0 0
        %342 = vmatpush1.bf16.xpose.msra.mxu0 %v320
        %343 = vmatprep.subr.bf16.mxu0 0
        %344 = vmatpush1.bf16.xpose.msra.mxu0 %v323
        %345 = vmatprep.subr.bf16.mxu0 0
        %346 = vmatpush1.bf16.xpose.msra.mxu0 %v326
        %347 = vmatprep.subr.bf16.mxu0 0
        %348 = vmatpush1.bf16.xpose.msra.mxu0 %v329
        %349 = vmatprep.subr.bf16.mxu0 0
        %350 = vmatpush1.bf16.xpose.msra.mxu0 %v332
        %351 = vmatprep.subr.bf16.mxu0 0
        %352 = vmatpush1.bf16.xpose.msra.mxu0 %v335
        %353 = vmatprep.subr.bf16.mxu0 0
        %354 = vmatpush1.bf16.xpose.msra.mxu0 0
        %355 = vmatprep.subr.bf16.mxu0 0
        %356 = vmatpush1.bf16.xpose.msra.mxu0 0
        %357 = vmatprep.subr.bf16.mxu0 0
        %358 = vmatpush1.bf16.xpose.msra.mxu0 0
        %359 = vmatprep.subr.bf16.mxu0 0
        %360 = vmatpush1.bf16.xpose.msra.mxu0 0
        %361 = vmatprep.subr.bf16.mxu0 0
        %362 = vmatpush1.bf16.xpose.msra.mxu0 0
        %363 = vmatprep.subr.bf16.mxu0 0
        %364 = vmatpush1.bf16.xpose.msra.mxu0 0
        %365 = vmatprep.subr.bf16.mxu0 0
        %366 = vmatpush1.bf16.xpose.msra.mxu0 0
        %367 = vmatprep.subr.bf16.mxu0 0
        %368 = vmatpush1.bf16.xpose.msra.mxu0 0
        %369 = vmatprep.mubr.bf16.mxu0 0
        %370 = vmatmul.mubr.bf16.gmra.mrb[0].mxu0 %v311
        %v371 = vpop.f32.mrb[0].mxu0
        %v372 = vadd.f32 0.0, %v371
        %v373 = vpop.f32.mrb[0].mxu0
        %v374 = vpop.f32.mrb[0].mxu0
        %v375 = vpop.f32.mrb[0].mxu0
        %376 = vdwg.mxu0
        %377 = vst [vmem:[%s161] sm:$0xff] %v372
        %s378 = sand.u32 %s93, 1
        %s379 = scalar_lea.sflag [#allocation3], %s378
        %s380 = sand.u32 %s93, 1
        %s381 = smul.addr %s380, 8
        %s382 = scalar_lea.vmem [#allocation2], %s381
        // Predicated region
        $region33: #{prn_forward.1} parent=31 // pred_check
          %p383 = pneg %p103
        $region34: #{prn_forward.1} parent=31 // pred_check_branch
          %385 = sbr.rel (%p383) target = $region36
        $region35: #{prn_forward.1} parent=31 // pred_region
          %s387 = ssub.s32 128, 128
          %388 = vsyncadd %s379, %s387
          %s389 = smul.addr %s17, 128
          %s390 = scalar_lea.hbm %s3, %s389
          %s392 = sshll.u32 %s382, 4
          %s393 = int_to_ptr.vmem [resolvable:$true] %s392
          %395 = dma.vmem_to_hbm [thread:$0]  %s393, 128, %s390, %s379
        $region36: #{prn_forward.1} parent=31 // pred_fallthru
          _
      $region32: #{prn_forward.1} parent=5 // pred_fallthru
        _
      %p396 = scmp.le.s32.totalorder 2, %s12
      // Predicated region
      $region37: #{prn_forward.1} parent=5 // pred_check
        %p397 = pneg %p396
      $region38: #{prn_forward.1} parent=5 // pred_check_branch
        %399 = sbr.rel (%p397) target = $region40
      $region39: #{prn_forward.1} parent=5 // pred_region
        %s400 = ssub.s32 %s12, 2
        // Predicated region
        $region41: #{prn_forward.1} parent=39 // pred_check
          %p401 = pneg %p109
        $region42: #{prn_forward.1} parent=39 // pred_check_branch
          %403 = sbr.rel (%p401) target = $region44
        $region43: #{prn_forward.1} parent=39 // pred_region
          %s404 = sand.u32 %s94, 1
          %s405 = scalar_lea.sflag [#allocation3], %s404
          %s406 = sand.u32 %s94, 1
          %s407 = smul.addr %s406, 8
          %s408 = scalar_lea.vmem [#allocation2], %s407
          %409 = dma.done %s405, 128
        $region44: #{prn_forward.1} parent=39 // pred_fallthru
          _
      $region40: #{prn_forward.1} parent=5 // pred_fallthru
        _
    $region6: #{prn_forward.1} parent=1 // loop_footer
      %s16 = sadd.s32 1, %s12
    $region7: #{prn_forward.1} parent=1 // loop_footer_branch
      %11 = sbr.rel target = $region3
    $region8: #{prn_forward.1} parent=1 // loop_exit
      _
    %410 = vsyncpa [#allocation3], 1
    %s411 = scalar_lea.sflag [#allocation3], 1
    %412 = vsyncpa %s411, 1

</llo_original>
